<compile_context>
chip_gen: v6e
topology: v6e:2x2x1
jax: 0.10.0
libtpu: 0.0.40
codegen_flags: <defaults>
</compile_context>

<pallas_src>
import functools

import jax
import jax.numpy as jnp
from jax.experimental import pallas as pl
from jax.experimental.pallas import tpu as pltpu


def _round_up(n, m):
    return ((n + m - 1) // m) * m


def _default_tile_sizes():
    """(TB, TL) per TPU generation; all choices keep 3 planes x 2 pipeline
    buffers comfortably under the scoped-VMEM limit on every chip."""
    kind = ""
    try:
        kind = jax.devices()[0].device_kind.lower()
    except Exception:
        pass
    if "v6" in kind:      # 128 MiB VMEM: larger lane tiles amortize per-step overhead
        return 256, 2048
    if "v7" in kind:      # 64 MiB VMEM: moderate tiles; HBM saturates anyway
        return 256, 1024
    return 256, 512       # v5e / unknown: ~820 GB/s HBM saturates at smaller tiles


def _vmem_limit_bytes(tb, tl):
    # 3 input planes x 2 pipeline buffers + (inv_len, out) + margin.
    need = 2 * 3 * tb * tl * 4 + 4 * tb * 4 + (1 << 20)
    return max(32 << 20, need)


def _wmse_kernel(eps, use_scale, approx_recip,
                 t_ref, s_ref, p_ref, inv_ref, out_ref):
    """One (TB, TL) tile: accumulate per-row masked squared error into out_ref."""
    l = pl.program_id(1)

    @pl.when(l == 0)
    def _init():
        out_ref[...] = jnp.zeros_like(out_ref)

    tgt = t_ref[...].astype(jnp.float32)
    s = s_ref[...].astype(jnp.float32)
    xp = p_ref[...].astype(jnp.float32)

    mask = (s != 0.0).astype(jnp.float32)
    diff = xp - tgt
    if use_scale:                      # nc == 3 path
        denom = s + eps
        if approx_recip:
            # EUP reciprocal (separate VLIW slot); ~2^-12 relative error.
            d = diff * pl.reciprocal(denom, approx=True)
        else:
            d = diff / denom           # exact divide, matches PyTorch semantics
    else:                              # nc == 2 path
        d = diff

    out_ref[...] += jnp.sum(d * d * mask, axis=1, keepdims=True)

    @pl.when(l == pl.num_programs(1) - 1)
    def _finalize():
        out_ref[...] = out_ref[...] * inv_ref[...]


def wmse_loss_from_planes(target, mask_src, x_pred, seq_len, *,
                          eps=1e-10, use_scale=True, approx_reciprocal=False,
                          block_b=None, block_l=None):
    """WMSE over pre-split [B, L] planes (preferred: no strided channel slicing).

    target:   [B, L]  (x[:, :, 1])
    mask_src: [B, L]  (x[:, :, 2] for nc=3 -- also the scale; x[:, :, 0] for nc=2)
    x_pred:   [B, L]
    seq_len:  [B] or scalar
    returns:  [B] float32
    """
    target = jnp.asarray(target, jnp.float32)
    mask_src = jnp.asarray(mask_src, jnp.float32)
    x_pred = jnp.asarray(x_pred, jnp.float32)
    B, L = target.shape

    tb_def, tl_def = _default_tile_sizes()
    TB = int(block_b) if block_b is not None else min(tb_def, _round_up(B, 8))
    TL = int(block_l) if block_l is not None else min(tl_def, _round_up(L, 128))
    Bp = _round_up(B, TB)
    Lp = _round_up(L, TL)

    def pad2(a):
        if a.shape == (Bp, Lp):
            return a
        return jnp.pad(a, ((0, Bp - B), (0, Lp - L)))

    t = pad2(target)
    s = pad2(mask_src)
    p = pad2(x_pred)

    seq_len = jnp.broadcast_to(jnp.asarray(seq_len, jnp.float32), (B,))
    inv_len = (1.0 / seq_len).reshape(B, 1)
    if Bp != B:
        inv_len = jnp.pad(inv_len, ((0, Bp - B), (0, 0)))

    grid = (Bp // TB, Lp // TL)
    kernel = functools.partial(_wmse_kernel, float(eps), bool(use_scale),
                               bool(approx_reciprocal))

    out = pl.pallas_call(
        kernel,
        out_shape=jax.ShapeDtypeStruct((Bp, 1), jnp.float32),
        grid=grid,
        in_specs=[
            pl.BlockSpec((TB, TL), lambda i, l: (i, l)),
            pl.BlockSpec((TB, TL), lambda i, l: (i, l)),
            pl.BlockSpec((TB, TL), lambda i, l: (i, l)),
            pl.BlockSpec((TB, 1), lambda i, l: (i, 0)),
        ],
        out_specs=pl.BlockSpec((TB, 1), lambda i, l: (i, 0)),
        compiler_params=pltpu.CompilerParams(
            dimension_semantics=("parallel", "arbitrary"),
            vmem_limit_bytes=_vmem_limit_bytes(TB, TL),
        ),
    )(t, s, p, inv_len)
    return out[:B, 0]


def wmse_loss(x, x_pred, seq_len, *, eps=1e-10, nc=3, approx_reciprocal=False):
    """Pallas implementation of WMSELoss.forward for x in [B, L, C] layout.

    NOTE: because x arrives channel-interleaved ([B, L, C]), the two channel
    planes are sliced out here (one extra XLA pass over x). Producers that can
    emit target / scale as separate [B, L] arrays (or channel-major [C, B, L])
    should call wmse_loss_from_planes directly to avoid that traffic.
    """
    x = jnp.asarray(x)
    if nc == 3:
        target, mask_src, use_scale = x[:, :, 1], x[:, :, 2], True
    else:
        target, mask_src, use_scale = x[:, :, 1], x[:, :, 0], False
    return wmse_loss_from_planes(target, mask_src, x_pred, seq_len, eps=eps,
                                 use_scale=use_scale,
                                 approx_reciprocal=approx_reciprocal)


class WMSELoss:
    """API-compatible stand-in for the PyTorch module."""

    def __init__(self, eps=1e-10, nc=3):
        self.eps = eps
        self.nc = nc

    def __call__(self, x, x_pred, seq_len):
        return wmse_loss(x, x_pred, seq_len, eps=self.eps, nc=self.nc)


def _wmse_ref(x, x_pred, seq_len, eps=1e-10, nc=3):
    # Pure-JAX reference mirroring the PyTorch module.
    x = jnp.asarray(x, jnp.float32)
    x_pred = jnp.asarray(x_pred, jnp.float32)
    if nc == 3:
        mask = (x[:, :, 2] != 0).astype(jnp.float32)
        d = (x_pred - x[:, :, 1]) / (x[:, :, 2] + eps)
    else:
        mask = (x[:, :, 0] != 0).astype(jnp.float32)
        d = x_pred - x[:, :, 1]
    return jnp.sum(d * d * mask, axis=1) / seq_len


if __name__ == "__main__":
    key = jax.random.PRNGKey(0)

    # --- Small shape straight from the module spec: batch=2, seq=8, 3 channels.
    B, L, C = 2, 8, 3
    k1, k2, k3, k4 = jax.random.split(key, 4)
    x = jax.random.normal(k1, (B, L, C), dtype=jnp.float32)
    zero_mask = jax.random.bernoulli(k3, p=0.3, shape=(B, L))
    x = x.at[:, :, 2].set(jnp.where(zero_mask, 0.0, x[:, :, 2]))
    x = x.at[:, :, 0].set(jnp.where(zero_mask, 0.0, x[:, :, 0]))
    x_pred = jax.random.normal(k2, (B, L), dtype=jnp.float32)
    seq_len = jnp.full((B,), float(L), dtype=jnp.float32)

    out = wmse_loss(x, x_pred, seq_len, eps=1e-10, nc=3)
    jax.block_until_ready(out)
    ref = _wmse_ref(x, x_pred, seq_len, eps=1e-10, nc=3)
    assert out.shape == (B,)
    assert jnp.allclose(out, ref, rtol=1e-5, atol=1e-5), (out, ref)

    # 2-channel path.
    out2 = wmse_loss(x, x_pred, seq_len, eps=1e-10, nc=2)
    jax.block_until_ready(out2)
    ref2 = _wmse_ref(x, x_pred, seq_len, eps=1e-10, nc=2)
    assert jnp.allclose(out2, ref2, rtol=1e-5, atol=1e-5), (out2, ref2)

    # Approx-reciprocal (EUP) path, looser tolerance.
    out_a = wmse_loss(x, x_pred, seq_len, eps=1e-10, nc=3, approx_reciprocal=True)
    jax.block_until_ready(out_a)
    assert jnp.allclose(out_a, ref, rtol=1e-2, atol=1e-2), (out_a, ref)

    # --- Non-aligned shape exercising the multi-tile (B, L) grid, the resident
    #     accumulator across L, and the zero-padded tails (forced small tiles
    #     so the grid is multi-step regardless of chip generation).
    B2, L2 = 20, 300
    k5, k6, k7 = jax.random.split(k4, 3)
    x_big = jax.random.normal(k5, (B2, L2, C), dtype=jnp.float32)
    zm = jax.random.bernoulli(k7, p=0.25, shape=(B2, L2))
    x_big = x_big.at[:, :, 2].set(jnp.where(zm, 0.0, x_big[:, :, 2]))
    xp_big = jax.random.normal(k6, (B2, L2), dtype=jnp.float32)
    sl_big = jnp.full((B2,), float(L2), dtype=jnp.float32)

    out3 = wmse_loss_from_planes(x_big[:, :, 1], x_big[:, :, 2], xp_big, sl_big,
                                 eps=1e-10, use_scale=True,
                                 block_b=8, block_l=128)
    jax.block_until_ready(out3)
    ref3 = _wmse_ref(x_big, xp_big, sl_big, eps=1e-10, nc=3)
    assert out3.shape == (B2,)
    assert jnp.allclose(out3, ref3, rtol=1e-4, atol=1e-5), (out3, ref3)

    print("KERNEL_OK")
</pallas_src>

<mosaic_0001>
module attributes {stable_mosaic.version = 11 : i64} {
  func.func @_wmse_kernel(%arg0: i32, %arg1: i32, %arg2: memref<8x128xf32, #tpu.memory_space<vmem>>, %arg3: memref<8x128xf32, #tpu.memory_space<vmem>>, %arg4: memref<8x128xf32, #tpu.memory_space<vmem>>, %arg5: memref<8x1xf32, #tpu.memory_space<vmem>>, %arg6: memref<8x1xf32, #tpu.memory_space<vmem>>) attributes {dimension_semantics = [#tpu.dimension_semantics<parallel>, #tpu.dimension_semantics<arbitrary>], iteration_bounds = array<i64: 1, 1>, scalar_prefetch = 0 : i64, scratch_operands = 0 : i64, tpu.core_type = #tpu.core_type<tc>, window_params = [{transform_indices = @transform_0, window_bounds = array<i64: 8, 128>}, {transform_indices = @transform_1, window_bounds = array<i64: 8, 128>}, {transform_indices = @transform_2, window_bounds = array<i64: 8, 128>}, {transform_indices = @transform_3, window_bounds = array<i64: 8, 1>}, {transform_indices = @transform_4, window_bounds = array<i64: 8, 1>}]} {
    %c0_i32 = arith.constant 0 : i32
    %0 = arith.cmpi eq, %arg1, %c0_i32 : i32
    %1 = arith.extui %0 : i1 to i32
    %c0_i32_0 = arith.constant 0 : i32
    %2 = arith.cmpi ne, %1, %c0_i32_0 : i32
    scf.if %2 {
      %cst_14 = arith.constant 0.000000e+00 : f32
      %24 = vector.broadcast %cst_14 : f32 to vector<8x1xf32>
      %c0_15 = arith.constant 0 : index
      %c0_16 = arith.constant 0 : index
      %25 = vector.load %arg6[%c0_15, %c0_16] : memref<8x1xf32, #tpu.memory_space<vmem>>, vector<8x1xf32>
      tpu.vector_store %arg6[%c0_15, %c0_16], %24 {strides = array<i32>} : memref<8x1xf32, #tpu.memory_space<vmem>>, vector<8x1xf32>,
    } else {
    }
    %c0 = arith.constant 0 : index
    %c0_1 = arith.constant 0 : index
    %3 = vector.load %arg2[%c0, %c0_1] : memref<8x128xf32, #tpu.memory_space<vmem>>, vector<8x128xf32>
    %c0_2 = arith.constant 0 : index
    %c0_3 = arith.constant 0 : index
    %4 = vector.load %arg3[%c0_2, %c0_3] : memref<8x128xf32, #tpu.memory_space<vmem>>, vector<8x128xf32>
    %c0_4 = arith.constant 0 : index
    %c0_5 = arith.constant 0 : index
    %5 = vector.load %arg4[%c0_4, %c0_5] : memref<8x128xf32, #tpu.memory_space<vmem>>, vector<8x128xf32>
    %cst = arith.constant 0.000000e+00 : f32
    %6 = vector.broadcast %cst : f32 to vector<8x128xf32>
    %7 = arith.cmpf one, %4, %6 : vector<8x128xf32>
    %8 = arith.extui %7 : vector<8x128xi1> to vector<8x128xi32>
    %9 = arith.sitofp %8 : vector<8x128xi32> to vector<8x128xf32>
    %10 = arith.subf %5, %3 : vector<8x128xf32>
    %cst_6 = arith.constant 1.000000e-10 : f32
    %11 = vector.broadcast %cst_6 : f32 to vector<8x128xf32>
    %12 = arith.addf %4, %11 : vector<8x128xf32>
    %13 = arith.divf %10, %12 : vector<8x128xf32>
    %c0_7 = arith.constant 0 : index
    %c0_8 = arith.constant 0 : index
    %14 = vector.load %arg6[%c0_7, %c0_8] : memref<8x1xf32, #tpu.memory_space<vmem>>, vector<8x1xf32>
    %15 = arith.mulf %13, %13 : vector<8x128xf32>
    %16 = arith.mulf %15, %9 : vector<8x128xf32>
    %cst_9 = arith.constant dense<0.000000e+00> : vector<8xf32>
    %17 = vector.multi_reduction <add>, %16, %cst_9 [1] : vector<8x128xf32> to vector<8xf32>
    %18 = vector.shape_cast %17 : vector<8xf32> to vector<8x1xf32>
    %19 = arith.addf %14, %18 : vector<8x1xf32>
    %c0_10 = arith.constant 0 : index
    %c0_11 = arith.constant 0 : index
    %20 = vector.load %arg6[%c0_10, %c0_11] : memref<8x1xf32, #tpu.memory_space<vmem>>, vector<8x1xf32>
    tpu.vector_store %arg6[%c0_10, %c0_11], %19 {strides = array<i32>} : memref<8x1xf32, #tpu.memory_space<vmem>>, vector<8x1xf32>,
    %c0_i32_12 = arith.constant 0 : i32
    %21 = arith.cmpi eq, %arg1, %c0_i32_12 : i32
    %22 = arith.extui %21 : i1 to i32
    %c0_i32_13 = arith.constant 0 : i32
    %23 = arith.cmpi ne, %22, %c0_i32_13 : i32
    scf.if %23 {
      %c0_14 = arith.constant 0 : index
      %c0_15 = arith.constant 0 : index
      %24 = vector.load %arg6[%c0_14, %c0_15] : memref<8x1xf32, #tpu.memory_space<vmem>>, vector<8x1xf32>
      %c0_16 = arith.constant 0 : index
      %c0_17 = arith.constant 0 : index
      %25 = vector.load %arg5[%c0_16, %c0_17] : memref<8x1xf32, #tpu.memory_space<vmem>>, vector<8x1xf32>
      %26 = arith.mulf %24, %25 : vector<8x1xf32>
      %c0_18 = arith.constant 0 : index
      %c0_19 = arith.constant 0 : index
      %27 = vector.load %arg6[%c0_18, %c0_19] : memref<8x1xf32, #tpu.memory_space<vmem>>, vector<8x1xf32>
      tpu.vector_store %arg6[%c0_18, %c0_19], %26 {strides = array<i32>} : memref<8x1xf32, #tpu.memory_space<vmem>>, vector<8x1xf32>,
    } else {
    }
    return
  }
  func.func @transform_0(%arg0: i32, %arg1: i32) -> (i32, i32) {
    %c0_i32 = arith.constant 0 : i32
    return %arg0, %arg1 : i32, i32
  }
  func.func @transform_1(%arg0: i32, %arg1: i32) -> (i32, i32) {
    %c0_i32 = arith.constant 0 : i32
    return %arg0, %arg1 : i32, i32
  }
  func.func @transform_2(%arg0: i32, %arg1: i32) -> (i32, i32) {
    %c0_i32 = arith.constant 0 : i32
    return %arg0, %arg1 : i32, i32
  }
  func.func @transform_3(%arg0: i32, %arg1: i32) -> (i32, i32) {
    %c0_i32 = arith.constant 0 : i32
    %c0_i32_0 = arith.constant 0 : i32
    return %arg0, %c0_i32 : i32, i32
  }
  func.func @transform_4(%arg0: i32, %arg1: i32) -> (i32, i32) {
    %c0_i32 = arith.constant 0 : i32
    %c0_i32_0 = arith.constant 0 : i32
    return %arg0, %c0_i32 : i32, i32
  }
}

</mosaic_0001>

<llo_original>
// kernel: tpu_custom_call.1
$region0: #{tpu_custom_call.1}
  #allocation0 [shape = 'u32[]', space=smem, size = 0x4, offset = 0x4, fixed_abs, tag = 'smem constant byte address 0x4 - core index']
  #allocation1 [shape = 'u32[144,128]{1,0:T(1,128)}', space=vmem, size = 0x12000, scoped, tag = 'internal scratch']
  %s0 = inlined_call_operand.vmem [shape: f32[8,128], index: 0, kind: input, shape index: {}]
  %s1 = inlined_call_operand.hbm [shape: f32[8,128], index: 1, kind: input, shape index: {}]
  %s2 = inlined_call_operand.hbm [shape: f32[8,128], index: 2, kind: input, shape index: {}]
  %s3 = inlined_call_operand.vmem [shape: f32[8,1], index: 3, kind: input, shape index: {}]
  %s4 = inlined_call_operand.vmem [shape: f32[8,1], index: 4, kind: output, shape index: {}]
  %s5 = sld [smem:[#allocation0]]
  $region42: #{tpu_custom_call.1} parent=0
    _
  %s7 = ssub.s32 1, %s5
  %s8 = scalar_select 0, %s7, %s5
  $region1: #{tpu_custom_call.1} parent=0
    #allocation2 [shape = 'u8[4096]{0}', space=vmem, size = 0x1000, scoped, tag = 'input window, operand 1, single buffered']
    #allocation3 [shape = 's32[1]{0}', space=sflag, size = 0x4, scoped, tag = 'scoped memory for tpu_custom_call.1']
    #allocation4 [shape = 'u8[4096]{0}', space=vmem, size = 0x1000, scoped, tag = 'input window, operand 2, single buffered']
    #allocation5 [shape = 's32[1]{0}', space=sflag, size = 0x4, scoped, tag = 'scoped memory for tpu_custom_call.1']
    %9 = vsyncpa [#allocation3], 0
    %10 = vsyncpa [#allocation5], 0
    // Predicated region
    $region2: #{tpu_custom_call.1} parent=1 // pred_check
      _
    $region3: #{tpu_custom_call.1} parent=1 // pred_check_branch
      %12 = sbr.rel (0) target = $region5
    $region4: #{tpu_custom_call.1} parent=1 // pred_region
      _
    $region5: #{tpu_custom_call.1} parent=1 // pred_fallthru
      _
    // Predicated region
    $region6: #{tpu_custom_call.1} parent=1 // pred_check
      _
    $region7: #{tpu_custom_call.1} parent=1 // pred_check_branch
      %14 = sbr.rel (0) target = $region9
    $region8: #{tpu_custom_call.1} parent=1 // pred_region
      %s16 = ssub.s32 128, 128
      %17 = vsyncadd [#allocation3], %s16
      %s19 = sshll.u32 [#allocation2], 4
      %s20 = int_to_ptr.vmem [resolvable:$true] %s19
      %22 = dma.hbm_to_vmem [thread:$0]  %s1, 128, %s20, [#allocation3]
    $region9: #{tpu_custom_call.1} parent=1 // pred_fallthru
      _
    // Predicated region
    $region10: #{tpu_custom_call.1} parent=1 // pred_check
      _
    $region11: #{tpu_custom_call.1} parent=1 // pred_check_branch
      %24 = sbr.rel (0) target = $region13
    $region12: #{tpu_custom_call.1} parent=1 // pred_region
      %s26 = ssub.s32 128, 128
      %27 = vsyncadd [#allocation5], %s26
      %s29 = sshll.u32 [#allocation4], 4
      %s30 = int_to_ptr.vmem [resolvable:$true] %s29
      %32 = dma.hbm_to_vmem [thread:$0]  %s2, 128, %s30, [#allocation5]
    $region13: #{tpu_custom_call.1} parent=1 // pred_fallthru
      _
    // Predicated region
    $region14: #{tpu_custom_call.1} parent=1 // pred_check
      _
    $region15: #{tpu_custom_call.1} parent=1 // pred_check_branch
      %34 = sbr.rel (0) target = $region17
    $region16: #{tpu_custom_call.1} parent=1 // pred_region
      _
    $region17: #{tpu_custom_call.1} parent=1 // pred_fallthru
      _
    // Predicated region
    $region18: #{tpu_custom_call.1} parent=1 // pred_check
      _
    $region19: #{tpu_custom_call.1} parent=1 // pred_check_branch
      %36 = sbr.rel (0) target = $region21
    $region20: #{tpu_custom_call.1} parent=1 // pred_region
      %37 = dma.done [#allocation3], 128
    $region21: #{tpu_custom_call.1} parent=1 // pred_fallthru
      _
    // Predicated region
    $region22: #{tpu_custom_call.1} parent=1 // pred_check
      _
    $region23: #{tpu_custom_call.1} parent=1 // pred_check_branch
      %39 = sbr.rel (0) target = $region25
    $region24: #{tpu_custom_call.1} parent=1 // pred_region
      %40 = dma.done [#allocation5], 128
    $region25: #{tpu_custom_call.1} parent=1 // pred_fallthru
      _
    %p41 = scmp.eq.s32.totalorder 0, 0
    // Predicated region
    $region26: #{tpu_custom_call.1} parent=1 // pred_check
      %p42 = pneg %p41
    $region27: #{tpu_custom_call.1} parent=1 // pred_check_branch
      %44 = sbr.rel (%p42) target = $region29
    $region28: #{tpu_custom_call.1} parent=1 // pred_region
      %vm45 = vcmask 7168
      %46 = vst.msk [vmem:[%s4] sm:$0xff] %vm45, 0.0
    $region29: #{tpu_custom_call.1} parent=1 // pred_fallthru
      _
    %v47 = vld [vmem:[%s0] sm:$0xff]
    %v48 = vld [vmem:[#allocation2] sm:$0xff]
    %v49 = vld [vmem:[#allocation4] sm:$0xff]
    %vm50 = vcmp.ne.f32.partialorder %v48, 0.0
    %v51 = vsel %vm50, 1, 0
    %v52 = vcvt.s32.f32 %v51
    %v53 = vsub.f32 %v49, %v47
    %v54 = vadd.f32 %v48, 1e-10
    %v55 = vrcp.pop %v54
    %v56 = vmul.f32 %v53, %v55
    %v57 = vld [vmem:[%s4] sm:$0xff]
    %v58 = vmul.f32 %v56, %v56
    %v59 = vmul.f32 %v58, %v52
    %60 = vadd.xlane.f32.xlu0 %v59
    %v61 = vpop.xlane.xlu0 %60
    %v62 = vadd.f32 %v57, %v61
    %vm63 = vcmask 7168
    %64 = vst.msk [vmem:[%s4] sm:$0xff] %vm63, %v62
    // Predicated region
    $region30: #{tpu_custom_call.1} parent=1 // pred_check
      %p65 = pneg %p41
    $region31: #{tpu_custom_call.1} parent=1 // pred_check_branch
      %67 = sbr.rel (%p65) target = $region33
    $region32: #{tpu_custom_call.1} parent=1 // pred_region
      %v68 = vld [vmem:[%s4] sm:$0xff]
      %v69 = vld [vmem:[%s3] sm:$0xff]
      %v70 = vmul.f32 %v68, %v69
      %71 = vst.msk [vmem:[%s4] sm:$0xff] %vm63, %v70
    $region33: #{tpu_custom_call.1} parent=1 // pred_fallthru
      _
    // Predicated region
    $region34: #{tpu_custom_call.1} parent=1 // pred_check
      _
    $region35: #{tpu_custom_call.1} parent=1 // pred_check_branch
      %73 = sbr.rel (0) target = $region37
    $region36: #{tpu_custom_call.1} parent=1 // pred_region
      _
    $region37: #{tpu_custom_call.1} parent=1 // pred_fallthru
      _
    // Predicated region
    $region38: #{tpu_custom_call.1} parent=1 // pred_check
      _
    $region39: #{tpu_custom_call.1} parent=1 // pred_check_branch
      %75 = sbr.rel (0) target = $region41
    $region40: #{tpu_custom_call.1} parent=1 // pred_region
      _
    $region41: #{tpu_custom_call.1} parent=1 // pred_fallthru
      _
    %76 = vsyncpa [#allocation3], 1
    %77 = vsyncpa [#allocation5], 1

</llo_original>
